<compile_context>
chip_gen: v7x
topology: tpu7x:2x2x1
jax: 0.10.0
libtpu: 0.0.40
codegen_flags: <defaults>
</compile_context>

<pallas_src>
import jax
import jax.numpy as jnp
from jax.experimental import pallas as pl
from jax.experimental.pallas import tpu as pltpu

INPUT_SIZE = 200
HIDDEN = 256
N_CLASSES = 10
OUT_PAD = 128            # lane-dense (128-wide) output slab
MAX_BATCH_TILE = 2048    # rows per grid step for large batches
NEG_INF = -1e30          # bias for padded logit columns -> exactly 0 softmax mass


def _round_up(x, m):
    return (x + m - 1) // m * m


def _cdiv(a, b):
    return -(-a // b)


def _choose_batch_tile(B):
    """Pick (rows-per-tile, num-grid-steps) for the batch dimension."""
    if B <= 64:
        # Single tile; round rows to the f32 sublane (8) / bf16 packing (16).
        bt = _round_up(B, 8) if B < 16 else _round_up(B, 16)
        return bt, 1
    # Even number of tiles (>= 2) so the "parallel" grid axis shards across
    # both TensorCores on v7x; each tile capped at MAX_BATCH_TILE rows.
    n = max(2, 2 * _cdiv(B, 2 * MAX_BATCH_TILE))
    bt = min(_round_up(_cdiv(B, n), 16), MAX_BATCH_TILE)
    return bt, _cdiv(B, bt)


def _mlp_kernel(x_ref, w1_ref, b1_ref, w2_ref, b2_ref, w3_ref, b3_ref,
                w4_ref, b4_ref, o_ref):
    """One batch tile of the full MLP forward + softmax.

    Matmul operands are bf16 (native MXU path); accumulation and all
    elementwise math (bias, ReLU, softmax) stay in f32.  Dropout = identity.
    """
    # Input arrives as raw f32 (bt, 200); cast to bf16 in-kernel (VPU, cheap)
    # and contract directly over K=200 (Mosaic pads/masks the remainder).
    x = x_ref[...].astype(jnp.bfloat16)

    # Layer 1: Linear(200->256) + ReLU  (Dropout = identity in eval)
    h = jnp.dot(x, w1_ref[...], preferred_element_type=jnp.float32) + b1_ref[...]
    h = jnp.maximum(h, 0.0).astype(jnp.bfloat16)

    # Layer 2: Linear(256->256) + ReLU
    h = jnp.dot(h, w2_ref[...], preferred_element_type=jnp.float32) + b2_ref[...]
    h = jnp.maximum(h, 0.0).astype(jnp.bfloat16)

    # Layer 3: Linear(256->256) + ReLU
    h = jnp.dot(h, w3_ref[...], preferred_element_type=jnp.float32) + b3_ref[...]
    h = jnp.maximum(h, 0.0).astype(jnp.bfloat16)

    # Layer 4: Linear(256->10), lane-padded to 128 columns.  Padded columns
    # carry a -1e30 bias so exp() underflows to exactly 0 (no leaked mass).
    logits = jnp.dot(h, w4_ref[...], preferred_element_type=jnp.float32) + b4_ref[...]
    m = jnp.max(logits, axis=-1, keepdims=True)
    e = jnp.exp(logits - m)
    denom = jnp.sum(e, axis=-1, keepdims=True)
    # Exact divide (not approx reciprocal): rows sum to 1 at f32 precision and
    # the one extra EUP op per row is not on the critical path.
    o_ref[...] = (e / denom).astype(o_ref.dtype)


def prepare_params(params):
    """One-time kernel-side parameter preprocessing (hoisted out of forward).

    params: dict with w1..w4 as (in, out) f32 and b1..b4 as (1, out) f32.
    Returns bf16 weights, with w4/b4 lane-padded from 10 to 128 columns
    (padded b4 columns = -1e30).  Call once; reuse across forward calls.
    """
    return {
        "w1": params["w1"].astype(jnp.bfloat16),                       # (200, 256)
        "b1": params["b1"].astype(jnp.float32),                        # (1, 256)
        "w2": params["w2"].astype(jnp.bfloat16),                       # (256, 256)
        "b2": params["b2"].astype(jnp.float32),
        "w3": params["w3"].astype(jnp.bfloat16),                       # (256, 256)
        "b3": params["b3"].astype(jnp.float32),
        "w4": jnp.pad(params["w4"], ((0, 0), (0, OUT_PAD - N_CLASSES))
                      ).astype(jnp.bfloat16),                          # (256, 128)
        "b4": jnp.pad(params["b4"], ((0, 0), (0, OUT_PAD - N_CLASSES)),
                      constant_values=NEG_INF).astype(jnp.float32),    # (1, 128)
    }


@jax.jit
def sound_linear_net_forward(x, prepared):
    """SoundLinearNet forward.

    x        : (B, 200) float32.
    prepared : output of prepare_params().
    returns  : (B, 10) float32 softmax probabilities.
    """
    B, F = x.shape
    assert F == INPUT_SIZE

    bt, n_tiles = _choose_batch_tile(B)

    tile = lambda i: (i, 0)   # batch-tiled blocks (x, output)
    rep = lambda i: (0, 0)    # replicated blocks (weights/biases, fetched once)

    out = pl.pallas_call(
        _mlp_kernel,
        out_shape=jax.ShapeDtypeStruct((B, OUT_PAD), jnp.float32),
        grid_spec=pltpu.PrefetchScalarGridSpec(
            num_scalar_prefetch=0,
            grid=(n_tiles,),
            in_specs=[
                pl.BlockSpec((bt, INPUT_SIZE), tile),     # x  (f32, full 200 lanes)
                pl.BlockSpec((INPUT_SIZE, HIDDEN), rep),  # w1 (bf16, 200x256)
                pl.BlockSpec((1, HIDDEN), rep),           # b1 (f32)
                pl.BlockSpec((HIDDEN, HIDDEN), rep),      # w2 (bf16)
                pl.BlockSpec((1, HIDDEN), rep),           # b2 (f32)
                pl.BlockSpec((HIDDEN, HIDDEN), rep),      # w3 (bf16)
                pl.BlockSpec((1, HIDDEN), rep),           # b3 (f32)
                pl.BlockSpec((HIDDEN, OUT_PAD), rep),     # w4 (bf16, lane-padded)
                pl.BlockSpec((1, OUT_PAD), rep),          # b4 (f32, -1e30 pad)
            ],
            out_specs=pl.BlockSpec((bt, OUT_PAD), tile),
        ),
        compiler_params=pltpu.CompilerParams(
            dimension_semantics=("parallel",),
            vmem_limit_bytes=32 * 1024 * 1024),
    )(x, prepared["w1"], prepared["b1"], prepared["w2"], prepared["b2"],
      prepared["w3"], prepared["b3"], prepared["w4"], prepared["b4"])

    # Layout plumbing: drop the padded logit lanes.  (Consumers that only need
    # argmax could take the lane-dense (B, 128) slab directly and skip this.)
    return out[:, :N_CLASSES]


def init_params(key):
    """Deterministic init mimicking nn.Linear's shapes.

    PyTorch stores Linear weights as (out, in); we generate that way and
    transpose to (in, out) for the kernel's x @ W convention.
    """
    dims = [(HIDDEN, INPUT_SIZE), (HIDDEN, HIDDEN),
            (HIDDEN, HIDDEN), (N_CLASSES, HIDDEN)]
    params = {}
    for idx, (fan_out, fan_in) in enumerate(dims, start=1):
        key, kw, kb = jax.random.split(key, 3)
        bound = 1.0 / jnp.sqrt(fan_in)
        w = jax.random.uniform(kw, (fan_out, fan_in), jnp.float32, -bound, bound)
        b = jax.random.uniform(kb, (fan_out,), jnp.float32, -bound, bound)
        params[f"w{idx}"] = jnp.transpose(w)          # (in, out)
        params[f"b{idx}"] = b.reshape(1, fan_out)     # (1, out)
    return params


def _reference_forward(x, params):
    """Plain-JAX f32 reference for a sanity check."""
    h = jnp.maximum(x @ params["w1"] + params["b1"], 0.0)
    h = jnp.maximum(h @ params["w2"] + params["b2"], 0.0)
    h = jnp.maximum(h @ params["w3"] + params["b3"], 0.0)
    logits = h @ params["w4"] + params["b4"]
    return jax.nn.softmax(logits, axis=1)


if __name__ == "__main__":
    key = jax.random.PRNGKey(0)
    key, kx, kp = jax.random.split(key, 3)

    B = 8  # small deterministic example batch
    x = jax.random.normal(kx, (B, INPUT_SIZE), jnp.float32)
    params = init_params(kp)

    # One-time parameter preprocessing (bf16 cast + lane padding), hoisted out
    # of the per-call forward.
    prepared = prepare_params(params)

    # TODO(synk): Dropout(0.4) is the identity in eval mode; training-mode RNG
    # masking is intentionally not implemented.
    out = sound_linear_net_forward(x, prepared)
    out = jax.block_until_ready(out)

    ref = _reference_forward(x, params)
    assert out.shape == (B, N_CLASSES)
    # Exact softmax normalization -> rows sum to 1 at f32 precision.
    assert jnp.allclose(jnp.sum(out, axis=1), 1.0, atol=1e-3)
    # bf16 MXU operands -> compare probabilities with bf16-level tolerance.
    assert jnp.allclose(out, ref, atol=5e-2)

    print("KERNEL_OK")
</pallas_src>

<mosaic_0001>
module attributes {stable_mosaic.version = 11 : i64} {
  func.func @_mlp_kernel(%arg0: i32, %arg1: memref<8x200xf32, #tpu.memory_space<vmem>>, %arg2: memref<200x256xbf16, #tpu.memory_space<vmem>>, %arg3: memref<1x256xf32, #tpu.memory_space<vmem>>, %arg4: memref<256x256xbf16, #tpu.memory_space<vmem>>, %arg5: memref<1x256xf32, #tpu.memory_space<vmem>>, %arg6: memref<256x256xbf16, #tpu.memory_space<vmem>>, %arg7: memref<1x256xf32, #tpu.memory_space<vmem>>, %arg8: memref<256x128xbf16, #tpu.memory_space<vmem>>, %arg9: memref<1x128xf32, #tpu.memory_space<vmem>>, %arg10: memref<8x128xf32, #tpu.memory_space<vmem>>) attributes {dimension_semantics = [#tpu.dimension_semantics<parallel>], iteration_bounds = array<i64: 1>, scalar_prefetch = 0 : i64, scratch_operands = 0 : i64, tpu.core_type = #tpu.core_type<tc>, window_params = [{transform_indices = @transform_0, window_bounds = array<i64: 8, 200>}, {pipeline_mode = #tpu.pipeline_mode<synchronous>, transform_indices = @transform_1, window_bounds = array<i64: 200, 256>}, {pipeline_mode = #tpu.pipeline_mode<synchronous>, transform_indices = @transform_2, window_bounds = array<i64: 1, 256>}, {pipeline_mode = #tpu.pipeline_mode<synchronous>, transform_indices = @transform_3, window_bounds = array<i64: 256, 256>}, {pipeline_mode = #tpu.pipeline_mode<synchronous>, transform_indices = @transform_4, window_bounds = array<i64: 1, 256>}, {pipeline_mode = #tpu.pipeline_mode<synchronous>, transform_indices = @transform_5, window_bounds = array<i64: 256, 256>}, {pipeline_mode = #tpu.pipeline_mode<synchronous>, transform_indices = @transform_6, window_bounds = array<i64: 1, 256>}, {pipeline_mode = #tpu.pipeline_mode<synchronous>, transform_indices = @transform_7, window_bounds = array<i64: 256, 128>}, {pipeline_mode = #tpu.pipeline_mode<synchronous>, transform_indices = @transform_8, window_bounds = array<i64: 1, 128>}, {transform_indices = @transform_9, window_bounds = array<i64: 8, 128>}]} {
    %c0 = arith.constant 0 : index
    %c0_0 = arith.constant 0 : index
    %0 = vector.load %arg1[%c0, %c0_0] : memref<8x200xf32, #tpu.memory_space<vmem>>, vector<8x200xf32>
    %1 = arith.truncf %0 : vector<8x200xf32> to vector<8x200xbf16>
    %c0_1 = arith.constant 0 : index
    %c0_2 = arith.constant 0 : index
    %2 = vector.load %arg2[%c0_1, %c0_2] : memref<200x256xbf16, #tpu.memory_space<vmem>>, vector<200x256xbf16>
    %cst = arith.constant dense<0.000000e+00> : vector<8x256xf32>
    %3 = tpu.matmul %1, %2, %cst {dimension_numbers = #tpu.dot_dimension_numbers<[1], [0], [0], [1], [0, 0, 1, 1], [], []>} : vector<8x200xbf16>, vector<200x256xbf16>, vector<8x256xf32> -> vector<8x256xf32>
    %c0_3 = arith.constant 0 : index
    %c0_4 = arith.constant 0 : index
    %4 = vector.load %arg3[%c0_3, %c0_4] : memref<1x256xf32, #tpu.memory_space<vmem>>, vector<1x256xf32>
    %5 = vector.broadcast %4 : vector<1x256xf32> to vector<8x256xf32>
    %6 = arith.addf %3, %5 : vector<8x256xf32>
    %cst_5 = arith.constant 0.000000e+00 : f32
    %7 = vector.broadcast %cst_5 : f32 to vector<8x256xf32>
    %8 = arith.maximumf %6, %7 : vector<8x256xf32>
    %9 = arith.truncf %8 : vector<8x256xf32> to vector<8x256xbf16>
    %c0_6 = arith.constant 0 : index
    %c0_7 = arith.constant 0 : index
    %10 = vector.load %arg4[%c0_6, %c0_7] : memref<256x256xbf16, #tpu.memory_space<vmem>>, vector<256x256xbf16>
    %cst_8 = arith.constant dense<0.000000e+00> : vector<8x256xf32>
    %11 = tpu.matmul %9, %10, %cst_8 {dimension_numbers = #tpu.dot_dimension_numbers<[1], [0], [0], [1], [0, 0, 1, 1], [], []>} : vector<8x256xbf16>, vector<256x256xbf16>, vector<8x256xf32> -> vector<8x256xf32>
    %c0_9 = arith.constant 0 : index
    %c0_10 = arith.constant 0 : index
    %12 = vector.load %arg5[%c0_9, %c0_10] : memref<1x256xf32, #tpu.memory_space<vmem>>, vector<1x256xf32>
    %13 = vector.broadcast %12 : vector<1x256xf32> to vector<8x256xf32>
    %14 = arith.addf %11, %13 : vector<8x256xf32>
    %cst_11 = arith.constant 0.000000e+00 : f32
    %15 = vector.broadcast %cst_11 : f32 to vector<8x256xf32>
    %16 = arith.maximumf %14, %15 : vector<8x256xf32>
    %17 = arith.truncf %16 : vector<8x256xf32> to vector<8x256xbf16>
    %c0_12 = arith.constant 0 : index
    %c0_13 = arith.constant 0 : index
    %18 = vector.load %arg6[%c0_12, %c0_13] : memref<256x256xbf16, #tpu.memory_space<vmem>>, vector<256x256xbf16>
    %cst_14 = arith.constant dense<0.000000e+00> : vector<8x256xf32>
    %19 = tpu.matmul %17, %18, %cst_14 {dimension_numbers = #tpu.dot_dimension_numbers<[1], [0], [0], [1], [0, 0, 1, 1], [], []>} : vector<8x256xbf16>, vector<256x256xbf16>, vector<8x256xf32> -> vector<8x256xf32>
    %c0_15 = arith.constant 0 : index
    %c0_16 = arith.constant 0 : index
    %20 = vector.load %arg7[%c0_15, %c0_16] : memref<1x256xf32, #tpu.memory_space<vmem>>, vector<1x256xf32>
    %21 = vector.broadcast %20 : vector<1x256xf32> to vector<8x256xf32>
    %22 = arith.addf %19, %21 : vector<8x256xf32>
    %cst_17 = arith.constant 0.000000e+00 : f32
    %23 = vector.broadcast %cst_17 : f32 to vector<8x256xf32>
    %24 = arith.maximumf %22, %23 : vector<8x256xf32>
    %25 = arith.truncf %24 : vector<8x256xf32> to vector<8x256xbf16>
    %c0_18 = arith.constant 0 : index
    %c0_19 = arith.constant 0 : index
    %26 = vector.load %arg8[%c0_18, %c0_19] : memref<256x128xbf16, #tpu.memory_space<vmem>>, vector<256x128xbf16>
    %cst_20 = arith.constant dense<0.000000e+00> : vector<8x128xf32>
    %27 = tpu.matmul %25, %26, %cst_20 {dimension_numbers = #tpu.dot_dimension_numbers<[1], [0], [0], [1], [0, 0, 1, 1], [], []>} : vector<8x256xbf16>, vector<256x128xbf16>, vector<8x128xf32> -> vector<8x128xf32>
    %c0_21 = arith.constant 0 : index
    %c0_22 = arith.constant 0 : index
    %28 = vector.load %arg9[%c0_21, %c0_22] : memref<1x128xf32, #tpu.memory_space<vmem>>, vector<1x128xf32>
    %29 = vector.broadcast %28 : vector<1x128xf32> to vector<8x128xf32>
    %30 = arith.addf %27, %29 : vector<8x128xf32>
    %cst_23 = arith.constant dense<0xFF800000> : vector<8xf32>
    %31 = vector.multi_reduction <maximumf>, %30, %cst_23 [1] : vector<8x128xf32> to vector<8xf32>
    %32 = vector.shape_cast %31 : vector<8xf32> to vector<8x1xf32>
    %33 = vector.broadcast %32 : vector<8x1xf32> to vector<8x128xf32>
    %34 = arith.subf %30, %33 : vector<8x128xf32>
    %35 = math.exp %34 : vector<8x128xf32>
    %cst_24 = arith.constant dense<0.000000e+00> : vector<8xf32>
    %36 = vector.multi_reduction <add>, %35, %cst_24 [1] : vector<8x128xf32> to vector<8xf32>
    %37 = vector.shape_cast %36 : vector<8xf32> to vector<8x1xf32>
    %38 = vector.broadcast %37 : vector<8x1xf32> to vector<8x128xf32>
    %39 = arith.divf %35, %38 : vector<8x128xf32>
    %c0_25 = arith.constant 0 : index
    %c0_26 = arith.constant 0 : index
    %40 = vector.load %arg10[%c0_25, %c0_26] : memref<8x128xf32, #tpu.memory_space<vmem>>, vector<8x128xf32>
    tpu.vector_store %arg10[%c0_25, %c0_26], %39 {strides = array<i32>} : memref<8x128xf32, #tpu.memory_space<vmem>>, vector<8x128xf32>,
    return
  }
  func.func @transform_0(%arg0: i32) -> (i32, i32) {
    %c0_i32 = arith.constant 0 : i32
    %c0_i32_0 = arith.constant 0 : i32
    return %arg0, %c0_i32 : i32, i32
  }
  func.func @transform_1(%arg0: i32) -> (i32, i32) {
    %c0_i32 = arith.constant 0 : i32
    %c0_i32_0 = arith.constant 0 : i32
    %c0_i32_1 = arith.constant 0 : i32
    return %c0_i32, %c0_i32_0 : i32, i32
  }
  func.func @transform_2(%arg0: i32) -> (i32, i32) {
    %c0_i32 = arith.constant 0 : i32
    %c0_i32_0 = arith.constant 0 : i32
    %c0_i32_1 = arith.constant 0 : i32
    return %c0_i32, %c0_i32_0 : i32, i32
  }
  func.func @transform_3(%arg0: i32) -> (i32, i32) {
    %c0_i32 = arith.constant 0 : i32
    %c0_i32_0 = arith.constant 0 : i32
    %c0_i32_1 = arith.constant 0 : i32
    return %c0_i32, %c0_i32_0 : i32, i32
  }
  func.func @transform_4(%arg0: i32) -> (i32, i32) {
    %c0_i32 = arith.constant 0 : i32
    %c0_i32_0 = arith.constant 0 : i32
    %c0_i32_1 = arith.constant 0 : i32
    return %c0_i32, %c0_i32_0 : i32, i32
  }
  func.func @transform_5(%arg0: i32) -> (i32, i32) {
    %c0_i32 = arith.constant 0 : i32
    %c0_i32_0 = arith.constant 0 : i32
    %c0_i32_1 = arith.constant 0 : i32
    return %c0_i32, %c0_i32_0 : i32, i32
  }
  func.func @transform_6(%arg0: i32) -> (i32, i32) {
    %c0_i32 = arith.constant 0 : i32
    %c0_i32_0 = arith.constant 0 : i32
    %c0_i32_1 = arith.constant 0 : i32
    return %c0_i32, %c0_i32_0 : i32, i32
  }
  func.func @transform_7(%arg0: i32) -> (i32, i32) {
    %c0_i32 = arith.constant 0 : i32
    %c0_i32_0 = arith.constant 0 : i32
    %c0_i32_1 = arith.constant 0 : i32
    return %c0_i32, %c0_i32_0 : i32, i32
  }
  func.func @transform_8(%arg0: i32) -> (i32, i32) {
    %c0_i32 = arith.constant 0 : i32
    %c0_i32_0 = arith.constant 0 : i32
    %c0_i32_1 = arith.constant 0 : i32
    return %c0_i32, %c0_i32_0 : i32, i32
  }
  func.func @transform_9(%arg0: i32) -> (i32, i32) {
    %c0_i32 = arith.constant 0 : i32
    %c0_i32_0 = arith.constant 0 : i32
    return %arg0, %c0_i32 : i32, i32
  }
}

</mosaic_0001>

<llo_original>
// kernel: sound_linear_net_forward.1
$region0: #{sound_linear_net_forward.1}
  #allocation0 [shape = 'u32[]', space=smem, size = 0x4, offset = 0x4, fixed_abs, tag = 'smem constant byte address 0x4 - core index']
  #allocation1 [shape = 'u32[144,128]{1,0:T(1,128)}', space=vmem, size = 0x12000, scoped, tag = 'internal scratch']
  %s0 = inlined_call_operand.hbm [shape: f32[8,200], index: 0, kind: input, shape index: {}]
  %s1 = inlined_call_operand.hbm [shape: bf16[200,256], index: 1, kind: input, shape index: {}]
  %s2 = inlined_call_operand.vmem [shape: f32[1,256], index: 2, kind: input, shape index: {}]
  %s3 = inlined_call_operand.hbm [shape: bf16[256,256], index: 3, kind: input, shape index: {}]
  %s4 = inlined_call_operand.vmem [shape: f32[1,256], index: 4, kind: input, shape index: {}]
  %s5 = inlined_call_operand.hbm [shape: bf16[256,256], index: 5, kind: input, shape index: {}]
  %s6 = inlined_call_operand.vmem [shape: f32[1,256], index: 6, kind: input, shape index: {}]
  %s7 = inlined_call_operand.hbm [shape: bf16[256,128], index: 7, kind: input, shape index: {}]
  %s8 = inlined_call_operand.vmem [shape: f32[1,128], index: 8, kind: input, shape index: {}]
  %s9 = inlined_call_operand.hbm [shape: f32[8,128], index: 9, kind: output, shape index: {}]
  %s10 = sld [smem:[#allocation0]]
  $region66: #{sound_linear_net_forward.1} parent=0
    _
  %s12 = ssub.s32 1, %s10
  %s13 = scalar_select 0, %s12, %s10
  $region1: #{sound_linear_net_forward.1} parent=0
    #allocation2 [shape = 'u8[8192]{0}', space=vmem, size = 0x2000, scoped, tag = 'input window, operand 0, single buffered']
    #allocation3 [shape = 's32[1]{0}', space=sflag, size = 0x4, scoped, tag = 'scoped memory for sound_linear_net_forward.1']
    #allocation4 [shape = 's32[1]{0}', space=sflag, size = 0x4, scoped, tag = 'scoped memory for sound_linear_net_forward.1']
    #allocation5 [shape = 'u8[102400]{0}', space=vmem, size = 0x19000, scoped, tag = 'input window, operand 1, single buffered']
    #allocation6 [shape = 's32[1]{0}', space=sflag, size = 0x4, scoped, tag = 'scoped memory for sound_linear_net_forward.1']
    #allocation7 [shape = 'u8[131072]{0}', space=vmem, size = 0x20000, scoped, tag = 'input window, operand 3, single buffered']
    #allocation8 [shape = 'u8[131072]{0}', space=vmem, size = 0x20000, scoped, tag = 'input window, operand 5, single buffered']
    #allocation9 [shape = 's32[1]{0}', space=sflag, size = 0x4, scoped, tag = 'scoped memory for sound_linear_net_forward.1']
    #allocation10 [shape = 'u8[65536]{0}', space=vmem, size = 0x10000, scoped, tag = 'input window, operand 7, single buffered']
    #allocation11 [shape = 'u8[4096]{0}', space=vmem, size = 0x1000, scoped, tag = 'output window, operand 0, single buffered']
    %14 = vsyncpa [#allocation3], 0
    %15 = vsyncpa [#allocation6], 0
    %16 = vsyncpa [#allocation9], 0
    %17 = vsyncpa [#allocation4], 0
    // Predicated region
    $region2: #{sound_linear_net_forward.1} parent=1 // pred_check
      _
    $region3: #{sound_linear_net_forward.1} parent=1 // pred_check_branch
      %19 = sbr.rel (0) target = $region5
    $region4: #{sound_linear_net_forward.1} parent=1 // pred_region
      %s21 = ssub.s32 256, 256
      %22 = vsyncadd [#allocation3], %s21
      %s24 = sshll.u32 [#allocation2], 4
      %s25 = int_to_ptr.vmem [resolvable:$true] %s24
      %27 = dma.hbm_to_vmem [thread:$0]  %s0, 256, %s25, [#allocation3]
    $region5: #{sound_linear_net_forward.1} parent=1 // pred_fallthru
      _
    // Predicated region
    $region6: #{sound_linear_net_forward.1} parent=1 // pred_check
      _
    $region7: #{sound_linear_net_forward.1} parent=1 // pred_check_branch
      %29 = sbr.rel (0) target = $region9
    $region8: #{sound_linear_net_forward.1} parent=1 // pred_region
      %s31 = ssub.s32 3200, 3200
      %32 = vsyncadd [#allocation6], %s31
      %s33 = sshll.u32 [#allocation5], 4
      %s34 = int_to_ptr.vmem [resolvable:$true] %s33
      %39 = dma.hbm_to_vmem [thread:$0]  %s1, 3200, %s34, [#allocation6], 128, 128, 8
    $region9: #{sound_linear_net_forward.1} parent=1 // pred_fallthru
      _
    // Predicated region
    $region10: #{sound_linear_net_forward.1} parent=1 // pred_check
      _
    $region11: #{sound_linear_net_forward.1} parent=1 // pred_check_branch
      %41 = sbr.rel (0) target = $region13
    $region12: #{sound_linear_net_forward.1} parent=1 // pred_region
      _
    $region13: #{sound_linear_net_forward.1} parent=1 // pred_fallthru
      _
    // Predicated region
    $region14: #{sound_linear_net_forward.1} parent=1 // pred_check
      _
    $region15: #{sound_linear_net_forward.1} parent=1 // pred_check_branch
      %43 = sbr.rel (0) target = $region17
    $region16: #{sound_linear_net_forward.1} parent=1 // pred_region
      %s45 = ssub.s32 4096, 4096
      %46 = vsyncadd [#allocation6], %s45
      %s47 = sshll.u32 [#allocation7], 4
      %s48 = int_to_ptr.vmem [resolvable:$true] %s47
      %53 = dma.hbm_to_vmem [thread:$0]  %s3, 4096, %s48, [#allocation6], 128, 128, 8
    $region17: #{sound_linear_net_forward.1} parent=1 // pred_fallthru
      _
    // Predicated region
    $region18: #{sound_linear_net_forward.1} parent=1 // pred_check
      _
    $region19: #{sound_linear_net_forward.1} parent=1 // pred_check_branch
      %55 = sbr.rel (0) target = $region21
    $region20: #{sound_linear_net_forward.1} parent=1 // pred_region
      _
    $region21: #{sound_linear_net_forward.1} parent=1 // pred_fallthru
      _
    // Predicated region
    $region22: #{sound_linear_net_forward.1} parent=1 // pred_check
      _
    $region23: #{sound_linear_net_forward.1} parent=1 // pred_check_branch
      %57 = sbr.rel (0) target = $region25
    $region24: #{sound_linear_net_forward.1} parent=1 // pred_region
      %s59 = ssub.s32 4096, 4096
      %60 = vsyncadd [#allocation9], %s59
      %s61 = sshll.u32 [#allocation8], 4
      %s62 = int_to_ptr.vmem [resolvable:$true] %s61
      %67 = dma.hbm_to_vmem [thread:$0]  %s5, 4096, %s62, [#allocation9], 128, 128, 8
    $region25: #{sound_linear_net_forward.1} parent=1 // pred_fallthru
      _
    // Predicated region
    $region26: #{sound_linear_net_forward.1} parent=1 // pred_check
      _
    $region27: #{sound_linear_net_forward.1} parent=1 // pred_check_branch
      %69 = sbr.rel (0) target = $region29
    $region28: #{sound_linear_net_forward.1} parent=1 // pred_region
      _
    $region29: #{sound_linear_net_forward.1} parent=1 // pred_fallthru
      _
    // Predicated region
    $region30: #{sound_linear_net_forward.1} parent=1 // pred_check
      _
    $region31: #{sound_linear_net_forward.1} parent=1 // pred_check_branch
      %71 = sbr.rel (0) target = $region33
    $region32: #{sound_linear_net_forward.1} parent=1 // pred_region
      %s73 = ssub.s32 2048, 2048
      %74 = vsyncadd [#allocation9], %s73
      %s75 = sshll.u32 [#allocation10], 4
      %s76 = int_to_ptr.vmem [resolvable:$true] %s75
      %81 = dma.hbm_to_vmem [thread:$0]  %s7, 2048, %s76, [#allocation9], 64, 64, 4
    $region33: #{sound_linear_net_forward.1} parent=1 // pred_fallthru
      _
    // Predicated region
    $region34: #{sound_linear_net_forward.1} parent=1 // pred_check
      _
    $region35: #{sound_linear_net_forward.1} parent=1 // pred_check_branch
      %83 = sbr.rel (0) target = $region37
    $region36: #{sound_linear_net_forward.1} parent=1 // pred_region
      _
    $region37: #{sound_linear_net_forward.1} parent=1 // pred_fallthru
      _
    // Predicated region
    $region38: #{sound_linear_net_forward.1} parent=1 // pred_check
      _
    $region39: #{sound_linear_net_forward.1} parent=1 // pred_check_branch
      %85 = sbr.rel (0) target = $region41
    $region40: #{sound_linear_net_forward.1} parent=1 // pred_region
      %86 = dma.done [#allocation3], 256
    $region41: #{sound_linear_net_forward.1} parent=1 // pred_fallthru
      _
    // Predicated region
    $region42: #{sound_linear_net_forward.1} parent=1 // pred_check
      _
    $region43: #{sound_linear_net_forward.1} parent=1 // pred_check_branch
      %88 = sbr.rel (0) target = $region45
    $region44: #{sound_linear_net_forward.1} parent=1 // pred_region
      %89 = dma.done [#allocation6], 3200
    $region45: #{sound_linear_net_forward.1} parent=1 // pred_fallthru
      _
    // Predicated region
    $region46: #{sound_linear_net_forward.1} parent=1 // pred_check
      _
    $region47: #{sound_linear_net_forward.1} parent=1 // pred_check_branch
      %91 = sbr.rel (0) target = $region49
    $region48: #{sound_linear_net_forward.1} parent=1 // pred_region
      %92 = dma.done [#allocation6], 4096
    $region49: #{sound_linear_net_forward.1} parent=1 // pred_fallthru
      _
    // Predicated region
    $region50: #{sound_linear_net_forward.1} parent=1 // pred_check
      _
    $region51: #{sound_linear_net_forward.1} parent=1 // pred_check_branch
      %94 = sbr.rel (0) target = $region53
    $region52: #{sound_linear_net_forward.1} parent=1 // pred_region
      %95 = dma.done [#allocation9], 4096
    $region53: #{sound_linear_net_forward.1} parent=1 // pred_fallthru
      _
    // Predicated region
    $region54: #{sound_linear_net_forward.1} parent=1 // pred_check
      _
    $region55: #{sound_linear_net_forward.1} parent=1 // pred_check_branch
      %97 = sbr.rel (0) target = $region57
    $region56: #{sound_linear_net_forward.1} parent=1 // pred_region
      %98 = dma.done [#allocation9], 2048
    $region57: #{sound_linear_net_forward.1} parent=1 // pred_fallthru
      _
    %v100 = vld [vmem:[#allocation2] sm:$0xff]
    %v101 = vld [vmem:[#allocation2 + $0x8] sm:$0xff]
    %v102 = vpack.c.bf16 %v100, %v100
    %v103 = vpack.c.bf16 %v101, %v101
    %v104 = vld [vmem:[#allocation5] sm:$0xff]
    %v105 = vld [vmem:[#allocation5 + $0x8] sm:$0xff]
    %v106 = vld [vmem:[#allocation5 + $0x10] sm:$0xff]
    %v107 = vld [vmem:[#allocation5 + $0x18] sm:$0xff]
    %v108 = vld [vmem:[#allocation5 + $0x20] sm:$0xff]
    %v109 = vld [vmem:[#allocation5 + $0x28] sm:$0xff]
    %v110 = vld [vmem:[#allocation5 + $0x30] sm:$0xff]
    %v111 = vld [vmem:[#allocation5 + $0x38] sm:$0xff]
    %v112 = vld [vmem:[#allocation5 + $0x40] sm:$0xff]
    %v113 = vld [vmem:[#allocation5 + $0x48] sm:$0xff]
    %v114 = vld [vmem:[#allocation5 + $0x50] sm:$0xff]
    %v115 = vld [vmem:[#allocation5 + $0x58] sm:$0xff]
    %v116 = vld [vmem:[#allocation5 + $0x60] sm:$0xff]
    %v117 = vld [vmem:[#allocation5 + $0x68] sm:$0xff]
    %v118 = vld [vmem:[#allocation5 + $0x70] sm:$0xff]
    %v119 = vld [vmem:[#allocation5 + $0x78] sm:$0xff]
    %v120 = vld [vmem:[#allocation5 + $0x80] sm:$0xff]
    %v121 = vld [vmem:[#allocation5 + $0x88] sm:$0xff]
    %v122 = vld [vmem:[#allocation5 + $0x90] sm:$0xff]
    %v123 = vld [vmem:[#allocation5 + $0x98] sm:$0xff]
    %v124 = vld [vmem:[#allocation5 + $0xa0] sm:$0xff]
    %v125 = vld [vmem:[#allocation5 + $0xa8] sm:$0xff]
    %v126 = vld [vmem:[#allocation5 + $0xb0] sm:$0xff]
    %v127 = vld [vmem:[#allocation5 + $0xb8] sm:$0xff]
    %v128 = vld [vmem:[#allocation5 + $0xc0] sm:$0xff]
    %v129 = vld [vmem:[%s2] sm:$0x3]
    %v131 = vlaneseq
    %v132 = vshrl.u32 %v131, 7
    %v133 = vsub.s32 0, %v132
    %v134 = vrot.slane %v129, %v133
    %v135 = vlaneseq
    %v136 = vshrl.u32 %v135, 7
    %v137 = vsub.s32 1, %v136
    %v138 = vrot.slane %v129, %v137
    %v166 = vunpack.c.l.b16 %v104
    %v167 = vunpack.c.h.b16 %v104
    %v168 = vunpack.c.l.b16 %v105
    %v169 = vunpack.c.h.b16 %v105
    %v170 = vunpack.c.l.b16 %v106
    %v171 = vunpack.c.h.b16 %v106
    %v172 = vunpack.c.l.b16 %v107
    %v173 = vunpack.c.h.b16 %v107
    %v174 = vunpack.c.l.b16 %v108
    %v175 = vunpack.c.h.b16 %v108
    %v176 = vunpack.c.l.b16 %v109
    %v177 = vunpack.c.h.b16 %v109
    %v178 = vunpack.c.l.b16 %v110
    %v179 = vunpack.c.h.b16 %v110
    %v180 = vunpack.c.l.b16 %v111
    %v181 = vunpack.c.h.b16 %v111
    %v182 = vunpack.c.l.b16 %v112
    %v183 = vunpack.c.h.b16 %v112
    %v184 = vunpack.c.l.b16 %v113
    %v185 = vunpack.c.h.b16 %v113
    %v186 = vunpack.c.l.b16 %v114
    %v187 = vunpack.c.h.b16 %v114
    %v188 = vunpack.c.l.b16 %v115
    %v189 = vunpack.c.h.b16 %v115
    %v190 = vunpack.c.l.b16 %v116
    %v191 = vunpack.c.h.b16 %v116
    %v192 = vunpack.c.l.b16 %v117
    %v193 = vunpack.c.h.b16 %v117
    %v194 = vunpack.c.l.b16 %v118
    %v195 = vunpack.c.h.b16 %v118
    %v196 = vunpack.c.l.b16 %v119
    %v197 = vunpack.c.h.b16 %v119
    %v198 = vunpack.c.l.b16 %v120
    %v199 = vunpack.c.h.b16 %v120
    %v200 = vunpack.c.l.b16 %v121
    %v201 = vunpack.c.h.b16 %v121
    %v202 = vunpack.c.l.b16 %v122
    %v203 = vunpack.c.h.b16 %v122
    %v204 = vunpack.c.l.b16 %v123
    %v205 = vunpack.c.h.b16 %v123
    %v206 = vunpack.c.l.b16 %v124
    %v207 = vunpack.c.h.b16 %v124
    %v208 = vunpack.c.l.b16 %v125
    %v209 = vunpack.c.h.b16 %v125
    %v210 = vunpack.c.l.b16 %v126
    %v211 = vunpack.c.h.b16 %v126
    %v212 = vunpack.c.l.b16 %v127
    %v213 = vunpack.c.h.b16 %v127
    %v214 = vunpack.c.l.b16 %v128
    %v215 = vunpack.c.h.b16 %v128
    %v216 = vpack.c.b16 %v168, %v166
    %v217 = vpack.c.b16 %v169, %v167
    %v218 = vpack.c.b16 %v172, %v170
    %v219 = vpack.c.b16 %v173, %v171
    %v220 = vpack.c.b16 %v176, %v174
    %v221 = vpack.c.b16 %v177, %v175
    %v222 = vpack.c.b16 %v180, %v178
    %v223 = vpack.c.b16 %v181, %v179
    %v224 = vpack.c.b16 %v184, %v182
    %v225 = vpack.c.b16 %v185, %v183
    %v226 = vpack.c.b16 %v188, %v186
    %v227 = vpack.c.b16 %v189, %v187
    %v228 = vpack.c.b16 %v192, %v190
    %v229 = vpack.c.b16 %v193, %v191
    %v230 = vpack.c.b16 %v196, %v194
    %v231 = vpack.c.b16 %v197, %v195
    %v232 = vpack.c.b16 %v200, %v198
    %v233 = vpack.c.b16 %v201, %v199
    %v234 = vpack.c.b16 %v204, %v202
    %v235 = vpack.c.b16 %v205, %v203
    %v236 = vpack.c.b16 %v208, %v206
    %v237 = vpack.c.b16 %v209, %v207
    %v238 = vpack.c.b16 %v212, %v210
    %v239 = vpack.c.b16 %v213, %v211
    %v240 = vpack.c.b16 %v214, %v214
    %v241 = vpack.c.b16 %v215, %v215
    %vm266 = vcmask 588800
    %v268 = vsel %vm266, %v103, 0
    %vm270 = vcmask 1043456
    %v272 = vsel %vm270, %v240, 0
    %v275 = vsel %vm270, %v241, 0
    %277 = vmatprep.subr.bf16.mxu0 %v217
    %278 = vmatpush1.bf16.msra.mxu0 %v216
    %279 = vmatprep.subr.bf16.mxu0 %v219
    %280 = vmatpush1.bf16.msra.mxu0 %v218
    %281 = vmatprep.subr.bf16.mxu0 %v221
    %282 = vmatpush1.bf16.msra.mxu0 %v220
    %283 = vmatprep.subr.bf16.mxu0 %v223
    %284 = vmatpush1.bf16.msra.mxu0 %v222
    %285 = vmatprep.subr.bf16.mxu0 %v225
    %286 = vmatpush1.bf16.msra.mxu0 %v224
    %287 = vmatprep.subr.bf16.mxu0 %v227
    %288 = vmatpush1.bf16.msra.mxu0 %v226
    %289 = vmatprep.subr.bf16.mxu0 %v229
    %290 = vmatpush1.bf16.msra.mxu0 %v228
    %291 = vmatprep.subr.bf16.mxu0 %v231
    %292 = vmatpush1.bf16.msra.mxu0 %v230
    %293 = vmatprep.subr.bf16.mxu0 %v233
    %294 = vmatpush1.bf16.msra.mxu0 %v232
    %295 = vmatprep.subr.bf16.mxu0 %v235
    %296 = vmatpush1.bf16.msra.mxu0 %v234
    %297 = vmatprep.subr.bf16.mxu0 %v237
    %298 = vmatpush1.bf16.msra.mxu0 %v236
    %299 = vmatprep.subr.bf16.mxu0 %v239
    %300 = vmatpush1.bf16.msra.mxu0 %v238
    %301 = vmatprep.subr.bf16.mxu0 %v275
    %302 = vmatpush1.bf16.msra.mxu0 %v272
    %303 = vmatprep.subr.bf16.mxu0 0
    %304 = vmatpush1.bf16.msra.mxu0 0
    %305 = vmatprep.subr.bf16.mxu0 0
    %306 = vmatpush1.bf16.msra.mxu0 0
    %307 = vmatprep.subr.bf16.mxu0 0
    %308 = vmatpush1.bf16.msra.mxu0 0
    %309 = vmatprep.mubr.bf16.mxu0 %v268
    %310 = vmatmul.mubr.bf16.gmra.mrb[0].mxu0 %v102
    %v311 = vpop.f32.mrb[0].mxu0
    %v312 = vadd.f32 %v134, %v311
    %v313 = vpop.f32.mrb[0].mxu0
    %v314 = vadd.f32 %v138, %v313
    %v315 = vpop.f32.mrb[0].mxu0
    %v316 = vpop.f32.mrb[0].mxu0
    %317 = vdwg.mxu0
    %v318 = vmax.f32 %v312, 0.0
    %v319 = vmax.f32 %v314, 0.0
    %v320 = vpack.c.bf16 %v318, %v318
    %v321 = vpack.c.bf16 %v319, %v319
    %v322 = vld [vmem:[#allocation7] sm:$0xff]
    %v323 = vld [vmem:[#allocation7 + $0x8] sm:$0xff]
    %v324 = vld [vmem:[#allocation7 + $0x10] sm:$0xff]
    %v325 = vld [vmem:[#allocation7 + $0x18] sm:$0xff]
    %v326 = vld [vmem:[#allocation7 + $0x20] sm:$0xff]
    %v327 = vld [vmem:[#allocation7 + $0x28] sm:$0xff]
    %v328 = vld [vmem:[#allocation7 + $0x30] sm:$0xff]
    %v329 = vld [vmem:[#allocation7 + $0x38] sm:$0xff]
    %v330 = vld [vmem:[#allocation7 + $0x40] sm:$0xff]
    %v331 = vld [vmem:[#allocation7 + $0x48] sm:$0xff]
    %v332 = vld [vmem:[#allocation7 + $0x50] sm:$0xff]
    %v333 = vld [vmem:[#allocation7 + $0x58] sm:$0xff]
    %v334 = vld [vmem:[#allocation7 + $0x60] sm:$0xff]
    %v335 = vld [vmem:[#allocation7 + $0x68] sm:$0xff]
    %v336 = vld [vmem:[#allocation7 + $0x70] sm:$0xff]
    %v337 = vld [vmem:[#allocation7 + $0x78] sm:$0xff]
    %v338 = vld [vmem:[#allocation7 + $0x80] sm:$0xff]
    %v339 = vld [vmem:[#allocation7 + $0x88] sm:$0xff]
    %v340 = vld [vmem:[#allocation7 + $0x90] sm:$0xff]
    %v341 = vld [vmem:[#allocation7 + $0x98] sm:$0xff]
    %v342 = vld [vmem:[#allocation7 + $0xa0] sm:$0xff]
    %v343 = vld [vmem:[#allocation7 + $0xa8] sm:$0xff]
    %v344 = vld [vmem:[#allocation7 + $0xb0] sm:$0xff]
    %v345 = vld [vmem:[#allocation7 + $0xb8] sm:$0xff]
    %v346 = vld [vmem:[#allocation7 + $0xc0] sm:$0xff]
    %v347 = vld [vmem:[#allocation7 + $0xc8] sm:$0xff]
    %v348 = vld [vmem:[#allocation7 + $0xd0] sm:$0xff]
    %v349 = vld [vmem:[#allocation7 + $0xd8] sm:$0xff]
    %v350 = vld [vmem:[#allocation7 + $0xe0] sm:$0xff]
    %v351 = vld [vmem:[#allocation7 + $0xe8] sm:$0xff]
    %v352 = vld [vmem:[#allocation7 + $0xf0] sm:$0xff]
    %v353 = vld [vmem:[#allocation7 + $0xf8] sm:$0xff]
    %v354 = vld [vmem:[%s4] sm:$0x3]
    %v356 = vlaneseq
    %v357 = vshrl.u32 %v356, 7
    %v358 = vsub.s32 0, %v357
    %v359 = vrot.slane %v354, %v358
    %v360 = vlaneseq
    %v361 = vshrl.u32 %v360, 7
    %v362 = vsub.s32 1, %v361
    %v363 = vrot.slane %v354, %v362
    %v398 = vunpack.c.l.b16 %v322
    %v399 = vunpack.c.h.b16 %v322
    %v400 = vunpack.c.l.b16 %v323
    %v401 = vunpack.c.h.b16 %v323
    %v402 = vunpack.c.l.b16 %v324
    %v403 = vunpack.c.h.b16 %v324
    %v404 = vunpack.c.l.b16 %v325
    %v405 = vunpack.c.h.b16 %v325
    %v406 = vunpack.c.l.b16 %v326
    %v407 = vunpack.c.h.b16 %v326
    %v408 = vunpack.c.l.b16 %v327
    %v409 = vunpack.c.h.b16 %v327
    %v410 = vunpack.c.l.b16 %v328
    %v411 = vunpack.c.h.b16 %v328
    %v412 = vunpack.c.l.b16 %v329
    %v413 = vunpack.c.h.b16 %v329
    %v414 = vunpack.c.l.b16 %v330
    %v415 = vunpack.c.h.b16 %v330
    %v416 = vunpack.c.l.b16 %v331
    %v417 = vunpack.c.h.b16 %v331
    %v418 = vunpack.c.l.b16 %v332
    %v419 = vunpack.c.h.b16 %v332
    %v420 = vunpack.c.l.b16 %v333
    %v421 = vunpack.c.h.b16 %v333
    %v422 = vunpack.c.l.b16 %v334
    %v423 = vunpack.c.h.b16 %v334
    %v424 = vunpack.c.l.b16 %v335
    %v425 = vunpack.c.h.b16 %v335
    %v426 = vunpack.c.l.b16 %v336
    %v427 = vunpack.c.h.b16 %v336
    %v428 = vunpack.c.l.b16 %v337
    %v429 = vunpack.c.h.b16 %v337
    %v430 = vunpack.c.l.b16 %v338
    %v431 = vunpack.c.h.b16 %v338
    %v432 = vunpack.c.l.b16 %v339
    %v433 = vunpack.c.h.b16 %v339
    %v434 = vunpack.c.l.b16 %v340
    %v435 = vunpack.c.h.b16 %v340
    %v436 = vunpack.c.l.b16 %v341
    %v437 = vunpack.c.h.b16 %v341
    %v438 = vunpack.c.l.b16 %v342
    %v439 = vunpack.c.h.b16 %v342
    %v440 = vunpack.c.l.b16 %v343
    %v441 = vunpack.c.h.b16 %v343
    %v442 = vunpack.c.l.b16 %v344
    %v443 = vunpack.c.h.b16 %v344
    %v444 = vunpack.c.l.b16 %v345
    %v445 = vunpack.c.h.b16 %v345
    %v446 = vunpack.c.l.b16 %v346
    %v447 = vunpack.c.h.b16 %v346
    %v448 = vunpack.c.l.b16 %v347
    %v449 = vunpack.c.h.b16 %v347
    %v450 = vunpack.c.l.b16 %v348
    %v451 = vunpack.c.h.b16 %v348
    %v452 = vunpack.c.l.b16 %v349
    %v453 = vunpack.c.h.b16 %v349
    %v454 = vunpack.c.l.b16 %v350
    %v455 = vunpack.c.h.b16 %v350
    %v456 = vunpack.c.l.b16 %v351
    %v457 = vunpack.c.h.b16 %v351
    %v458 = vunpack.c.l.b16 %v352
    %v459 = vunpack.c.h.b16 %v352
    %v460 = vunpack.c.l.b16 %v353
    %v461 = vunpack.c.h.b16 %v353
    %v462 = vpack.c.b16 %v400, %v398
    %v463 = vpack.c.b16 %v401, %v399
    %v464 = vpack.c.b16 %v404, %v402
    %v465 = vpack.c.b16 %v405, %v403
    %v466 = vpack.c.b16 %v408, %v406
    %v467 = vpack.c.b16 %v409, %v407
    %v468 = vpack.c.b16 %v412, %v410
    %v469 = vpack.c.b16 %v413, %v411
    %v470 = vpack.c.b16 %v416, %v414
    %v471 = vpack.c.b16 %v417, %v415
    %v472 = vpack.c.b16 %v420, %v418
    %v473 = vpack.c.b16 %v421, %v419
    %v474 = vpack.c.b16 %v424, %v422
    %v475 = vpack.c.b16 %v425, %v423
    %v476 = vpack.c.b16 %v428, %v426
    %v477 = vpack.c.b16 %v429, %v427
    %v478 = vpack.c.b16 %v432, %v430
    %v479 = vpack.c.b16 %v433, %v431
    %v480 = vpack.c.b16 %v436, %v434
    %v481 = vpack.c.b16 %v437, %v435
    %v482 = vpack.c.b16 %v440, %v438
    %v483 = vpack.c.b16 %v441, %v439
    %v484 = vpack.c.b16 %v444, %v442
    %v485 = vpack.c.b16 %v445, %v443
    %v486 = vpack.c.b16 %v448, %v446
    %v487 = vpack.c.b16 %v449, %v447
    %v488 = vpack.c.b16 %v452, %v450
    %v489 = vpack.c.b16 %v453, %v451
    %v490 = vpack.c.b16 %v456, %v454
    %v491 = vpack.c.b16 %v457, %v455
    %v492 = vpack.c.b16 %v460, %v458
    %v493 = vpack.c.b16 %v461, %v459
    %526 = vmatprep.subr.bf16.mxu0 %v463
    %527 = vmatpush1.bf16.msra.mxu0 %v462
    %528 = vmatprep.subr.bf16.mxu0 %v465
    %529 = vmatpush1.bf16.msra.mxu0 %v464
    %530 = vmatprep.subr.bf16.mxu0 %v467
    %531 = vmatpush1.bf16.msra.mxu0 %v466
    %532 = vmatprep.subr.bf16.mxu0 %v469
    %533 = vmatpush1.bf16.msra.mxu0 %v468
    %534 = vmatprep.subr.bf16.mxu0 %v471
    %535 = vmatpush1.bf16.msra.mxu0 %v470
    %536 = vmatprep.subr.bf16.mxu0 %v473
    %537 = vmatpush1.bf16.msra.mxu0 %v472
    %538 = vmatprep.subr.bf16.mxu0 %v475
    %539 = vmatpush1.bf16.msra.mxu0 %v474
    %540 = vmatprep.subr.bf16.mxu0 %v477
    %541 = vmatpush1.bf16.msra.mxu0 %v476
    %542 = vmatprep.subr.bf16.mxu0 %v479
    %543 = vmatpush1.bf16.msra.mxu0 %v478
    %544 = vmatprep.subr.bf16.mxu0 %v481
    %545 = vmatpush1.bf16.msra.mxu0 %v480
    %546 = vmatprep.subr.bf16.mxu0 %v483
    %547 = vmatpush1.bf16.msra.mxu0 %v482
    %548 = vmatprep.subr.bf16.mxu0 %v485
    %549 = vmatpush1.bf16.msra.mxu0 %v484
    %550 = vmatprep.subr.bf16.mxu0 %v487
    %551 = vmatpush1.bf16.msra.mxu0 %v486
    %552 = vmatprep.subr.bf16.mxu0 %v489
    %553 = vmatpush1.bf16.msra.mxu0 %v488
    %554 = vmatprep.subr.bf16.mxu0 %v491
    %555 = vmatpush1.bf16.msra.mxu0 %v490
    %556 = vmatprep.subr.bf16.mxu0 %v493
    %557 = vmatpush1.bf16.msra.mxu0 %v492
    %558 = vmatprep.mubr.bf16.mxu0 %v321
    %559 = vmatmul.mubr.bf16.gmra.mrb[0].mxu0 %v320
    %v560 = vpop.f32.mrb[0].mxu0
    %v561 = vadd.f32 %v359, %v560
    %v562 = vpop.f32.mrb[0].mxu0
    %v563 = vadd.f32 %v363, %v562
    %v564 = vpop.f32.mrb[0].mxu0
    %v565 = vpop.f32.mrb[0].mxu0
    %566 = vdwg.mxu0
    %v567 = vmax.f32 %v561, 0.0
    %v568 = vmax.f32 %v563, 0.0
    %v569 = vpack.c.bf16 %v567, %v567
    %v570 = vpack.c.bf16 %v568, %v568
    %v571 = vld [vmem:[#allocation8] sm:$0xff]
    %v572 = vld [vmem:[#allocation8 + $0x8] sm:$0xff]
    %v573 = vld [vmem:[#allocation8 + $0x10] sm:$0xff]
    %v574 = vld [vmem:[#allocation8 + $0x18] sm:$0xff]
    %v575 = vld [vmem:[#allocation8 + $0x20] sm:$0xff]
    %v576 = vld [vmem:[#allocation8 + $0x28] sm:$0xff]
    %v577 = vld [vmem:[#allocation8 + $0x30] sm:$0xff]
    %v578 = vld [vmem:[#allocation8 + $0x38] sm:$0xff]
    %v579 = vld [vmem:[#allocation8 + $0x40] sm:$0xff]
    %v580 = vld [vmem:[#allocation8 + $0x48] sm:$0xff]
    %v581 = vld [vmem:[#allocation8 + $0x50] sm:$0xff]
    %v582 = vld [vmem:[#allocation8 + $0x58] sm:$0xff]
    %v583 = vld [vmem:[#allocation8 + $0x60] sm:$0xff]
    %v584 = vld [vmem:[#allocation8 + $0x68] sm:$0xff]
    %v585 = vld [vmem:[#allocation8 + $0x70] sm:$0xff]
    %v586 = vld [vmem:[#allocation8 + $0x78] sm:$0xff]
    %v587 = vld [vmem:[#allocation8 + $0x80] sm:$0xff]
    %v588 = vld [vmem:[#allocation8 + $0x88] sm:$0xff]
    %v589 = vld [vmem:[#allocation8 + $0x90] sm:$0xff]
    %v590 = vld [vmem:[#allocation8 + $0x98] sm:$0xff]
    %v591 = vld [vmem:[#allocation8 + $0xa0] sm:$0xff]
    %v592 = vld [vmem:[#allocation8 + $0xa8] sm:$0xff]
    %v593 = vld [vmem:[#allocation8 + $0xb0] sm:$0xff]
    %v594 = vld [vmem:[#allocation8 + $0xb8] sm:$0xff]
    %v595 = vld [vmem:[#allocation8 + $0xc0] sm:$0xff]
    %v596 = vld [vmem:[#allocation8 + $0xc8] sm:$0xff]
    %v597 = vld [vmem:[#allocation8 + $0xd0] sm:$0xff]
    %v598 = vld [vmem:[#allocation8 + $0xd8] sm:$0xff]
    %v599 = vld [vmem:[#allocation8 + $0xe0] sm:$0xff]
    %v600 = vld [vmem:[#allocation8 + $0xe8] sm:$0xff]
    %v601 = vld [vmem:[#allocation8 + $0xf0] sm:$0xff]
    %v602 = vld [vmem:[#allocation8 + $0xf8] sm:$0xff]
    %v603 = vld [vmem:[%s6] sm:$0x3]
    %v605 = vlaneseq
    %v606 = vshrl.u32 %v605, 7
    %v607 = vsub.s32 0, %v606
    %v608 = vrot.slane %v603, %v607
    %v609 = vlaneseq
    %v610 = vshrl.u32 %v609, 7
    %v611 = vsub.s32 1, %v610
    %v612 = vrot.slane %v603, %v611
    %v647 = vunpack.c.l.b16 %v571
    %v648 = vunpack.c.h.b16 %v571
    %v649 = vunpack.c.l.b16 %v572
    %v650 = vunpack.c.h.b16 %v572
    %v651 = vunpack.c.l.b16 %v573
    %v652 = vunpack.c.h.b16 %v573
    %v653 = vunpack.c.l.b16 %v574
    %v654 = vunpack.c.h.b16 %v574
    %v655 = vunpack.c.l.b16 %v575
    %v656 = vunpack.c.h.b16 %v575
    %v657 = vunpack.c.l.b16 %v576
    %v658 = vunpack.c.h.b16 %v576
    %v659 = vunpack.c.l.b16 %v577
    %v660 = vunpack.c.h.b16 %v577
    %v661 = vunpack.c.l.b16 %v578
    %v662 = vunpack.c.h.b16 %v578
    %v663 = vunpack.c.l.b16 %v579
    %v664 = vunpack.c.h.b16 %v579
    %v665 = vunpack.c.l.b16 %v580
    %v666 = vunpack.c.h.b16 %v580
    %v667 = vunpack.c.l.b16 %v581
    %v668 = vunpack.c.h.b16 %v581
    %v669 = vunpack.c.l.b16 %v582
    %v670 = vunpack.c.h.b16 %v582
    %v671 = vunpack.c.l.b16 %v583
    %v672 = vunpack.c.h.b16 %v583
    %v673 = vunpack.c.l.b16 %v584
    %v674 = vunpack.c.h.b16 %v584
    %v675 = vunpack.c.l.b16 %v585
    %v676 = vunpack.c.h.b16 %v585
    %v677 = vunpack.c.l.b16 %v586
    %v678 = vunpack.c.h.b16 %v586
    %v679 = vunpack.c.l.b16 %v587
    %v680 = vunpack.c.h.b16 %v587
    %v681 = vunpack.c.l.b16 %v588
    %v682 = vunpack.c.h.b16 %v588
    %v683 = vunpack.c.l.b16 %v589
    %v684 = vunpack.c.h.b16 %v589
    %v685 = vunpack.c.l.b16 %v590
    %v686 = vunpack.c.h.b16 %v590
    %v687 = vunpack.c.l.b16 %v591
    %v688 = vunpack.c.h.b16 %v591
    %v689 = vunpack.c.l.b16 %v592
    %v690 = vunpack.c.h.b16 %v592
    %v691 = vunpack.c.l.b16 %v593
    %v692 = vunpack.c.h.b16 %v593
    %v693 = vunpack.c.l.b16 %v594
    %v694 = vunpack.c.h.b16 %v594
    %v695 = vunpack.c.l.b16 %v595
    %v696 = vunpack.c.h.b16 %v595
    %v697 = vunpack.c.l.b16 %v596
    %v698 = vunpack.c.h.b16 %v596
    %v699 = vunpack.c.l.b16 %v597
    %v700 = vunpack.c.h.b16 %v597
    %v701 = vunpack.c.l.b16 %v598
    %v702 = vunpack.c.h.b16 %v598
    %v703 = vunpack.c.l.b16 %v599
    %v704 = vunpack.c.h.b16 %v599
    %v705 = vunpack.c.l.b16 %v600
    %v706 = vunpack.c.h.b16 %v600
    %v707 = vunpack.c.l.b16 %v601
    %v708 = vunpack.c.h.b16 %v601
    %v709 = vunpack.c.l.b16 %v602
    %v710 = vunpack.c.h.b16 %v602
    %v711 = vpack.c.b16 %v649, %v647
    %v712 = vpack.c.b16 %v650, %v648
    %v713 = vpack.c.b16 %v653, %v651
    %v714 = vpack.c.b16 %v654, %v652
    %v715 = vpack.c.b16 %v657, %v655
    %v716 = vpack.c.b16 %v658, %v656
    %v717 = vpack.c.b16 %v661, %v659
    %v718 = vpack.c.b16 %v662, %v660
    %v719 = vpack.c.b16 %v665, %v663
    %v720 = vpack.c.b16 %v666, %v664
    %v721 = vpack.c.b16 %v669, %v667
    %v722 = vpack.c.b16 %v670, %v668
    %v723 = vpack.c.b16 %v673, %v671
    %v724 = vpack.c.b16 %v674, %v672
    %v725 = vpack.c.b16 %v677, %v675
    %v726 = vpack.c.b16 %v678, %v676
    %v727 = vpack.c.b16 %v681, %v679
    %v728 = vpack.c.b16 %v682, %v680
    %v729 = vpack.c.b16 %v685, %v683
    %v730 = vpack.c.b16 %v686, %v684
    %v731 = vpack.c.b16 %v689, %v687
    %v732 = vpack.c.b16 %v690, %v688
    %v733 = vpack.c.b16 %v693, %v691
    %v734 = vpack.c.b16 %v694, %v692
    %v735 = vpack.c.b16 %v697, %v695
    %v736 = vpack.c.b16 %v698, %v696
    %v737 = vpack.c.b16 %v701, %v699
    %v738 = vpack.c.b16 %v702, %v700
    %v739 = vpack.c.b16 %v705, %v703
    %v740 = vpack.c.b16 %v706, %v704
    %v741 = vpack.c.b16 %v709, %v707
    %v742 = vpack.c.b16 %v710, %v708
    %775 = vmatprep.subr.bf16.mxu0 %v712
    %776 = vmatpush1.bf16.msra.mxu0 %v711
    %777 = vmatprep.subr.bf16.mxu0 %v714
    %778 = vmatpush1.bf16.msra.mxu0 %v713
    %779 = vmatprep.subr.bf16.mxu0 %v716
    %780 = vmatpush1.bf16.msra.mxu0 %v715
    %781 = vmatprep.subr.bf16.mxu0 %v718
    %782 = vmatpush1.bf16.msra.mxu0 %v717
    %783 = vmatprep.subr.bf16.mxu0 %v720
    %784 = vmatpush1.bf16.msra.mxu0 %v719
    %785 = vmatprep.subr.bf16.mxu0 %v722
    %786 = vmatpush1.bf16.msra.mxu0 %v721
    %787 = vmatprep.subr.bf16.mxu0 %v724
    %788 = vmatpush1.bf16.msra.mxu0 %v723
    %789 = vmatprep.subr.bf16.mxu0 %v726
    %790 = vmatpush1.bf16.msra.mxu0 %v725
    %791 = vmatprep.subr.bf16.mxu0 %v728
    %792 = vmatpush1.bf16.msra.mxu0 %v727
    %793 = vmatprep.subr.bf16.mxu0 %v730
    %794 = vmatpush1.bf16.msra.mxu0 %v729
    %795 = vmatprep.subr.bf16.mxu0 %v732
    %796 = vmatpush1.bf16.msra.mxu0 %v731
    %797 = vmatprep.subr.bf16.mxu0 %v734
    %798 = vmatpush1.bf16.msra.mxu0 %v733
    %799 = vmatprep.subr.bf16.mxu0 %v736
    %800 = vmatpush1.bf16.msra.mxu0 %v735
    %801 = vmatprep.subr.bf16.mxu0 %v738
    %802 = vmatpush1.bf16.msra.mxu0 %v737
    %803 = vmatprep.subr.bf16.mxu0 %v740
    %804 = vmatpush1.bf16.msra.mxu0 %v739
    %805 = vmatprep.subr.bf16.mxu0 %v742
    %806 = vmatpush1.bf16.msra.mxu0 %v741
    %807 = vmatprep.mubr.bf16.mxu0 %v570
    %808 = vmatmul.mubr.bf16.gmra.mrb[0].mxu0 %v569
    %v809 = vpop.f32.mrb[0].mxu0
    %v810 = vadd.f32 %v608, %v809
    %v811 = vpop.f32.mrb[0].mxu0
    %v812 = vadd.f32 %v612, %v811
    %v813 = vpop.f32.mrb[0].mxu0
    %v814 = vpop.f32.mrb[0].mxu0
    %815 = vdwg.mxu0
    %v816 = vmax.f32 %v810, 0.0
    %v817 = vmax.f32 %v812, 0.0
    %v818 = vpack.c.bf16 %v816, %v816
    %v819 = vpack.c.bf16 %v817, %v817
    %v820 = vld [vmem:[#allocation10] sm:$0xf]
    %v821 = vld [vmem:[#allocation10 + $0x4] sm:$0xf]
    %v822 = vld [vmem:[#allocation10 + $0x8] sm:$0xf]
    %v823 = vld [vmem:[#allocation10 + $0xc] sm:$0xf]
    %v824 = vld [vmem:[#allocation10 + $0x10] sm:$0xf]
    %v825 = vld [vmem:[#allocation10 + $0x14] sm:$0xf]
    %v826 = vld [vmem:[#allocation10 + $0x18] sm:$0xf]
    %v827 = vld [vmem:[#allocation10 + $0x1c] sm:$0xf]
    %v828 = vld [vmem:[#allocation10 + $0x20] sm:$0xf]
    %v829 = vld [vmem:[#allocation10 + $0x24] sm:$0xf]
    %v830 = vld [vmem:[#allocation10 + $0x28] sm:$0xf]
    %v831 = vld [vmem:[#allocation10 + $0x2c] sm:$0xf]
    %v832 = vld [vmem:[#allocation10 + $0x30] sm:$0xf]
    %v833 = vld [vmem:[#allocation10 + $0x34] sm:$0xf]
    %v834 = vld [vmem:[#allocation10 + $0x38] sm:$0xf]
    %v835 = vld [vmem:[#allocation10 + $0x3c] sm:$0xf]
    %v836 = vld [vmem:[#allocation10 + $0x40] sm:$0xf]
    %v837 = vld [vmem:[#allocation10 + $0x44] sm:$0xf]
    %v838 = vld [vmem:[#allocation10 + $0x48] sm:$0xf]
    %v839 = vld [vmem:[#allocation10 + $0x4c] sm:$0xf]
    %v840 = vld [vmem:[#allocation10 + $0x50] sm:$0xf]
    %v841 = vld [vmem:[#allocation10 + $0x54] sm:$0xf]
    %v842 = vld [vmem:[#allocation10 + $0x58] sm:$0xf]
    %v843 = vld [vmem:[#allocation10 + $0x5c] sm:$0xf]
    %v844 = vld [vmem:[#allocation10 + $0x60] sm:$0xf]
    %v845 = vld [vmem:[#allocation10 + $0x64] sm:$0xf]
    %v846 = vld [vmem:[#allocation10 + $0x68] sm:$0xf]
    %v847 = vld [vmem:[#allocation10 + $0x6c] sm:$0xf]
    %v848 = vld [vmem:[#allocation10 + $0x70] sm:$0xf]
    %v849 = vld [vmem:[#allocation10 + $0x74] sm:$0xf]
    %v850 = vld [vmem:[#allocation10 + $0x78] sm:$0xf]
    %v851 = vld [vmem:[#allocation10 + $0x7c] sm:$0xf]
    %v852 = vld [vmem:[%s8] sm:$0x1]
    %v854 = vlaneseq
    %v855 = vshrl.u32 %v854, 7
    %v856 = vsub.s32 0, %v855
    %v857 = vrot.slane %v852, %v856
    %v891 = vunpack.c.l.b16 %v820
    %v892 = vunpack.c.l.b16 %v821
    %v893 = vunpack.c.l.b16 %v822
    %v894 = vunpack.c.l.b16 %v823
    %v895 = vunpack.c.l.b16 %v824
    %v896 = vunpack.c.l.b16 %v825
    %v897 = vunpack.c.l.b16 %v826
    %v898 = vunpack.c.l.b16 %v827
    %v899 = vunpack.c.l.b16 %v828
    %v900 = vunpack.c.l.b16 %v829
    %v901 = vunpack.c.l.b16 %v830
    %v902 = vunpack.c.l.b16 %v831
    %v903 = vunpack.c.l.b16 %v832
    %v904 = vunpack.c.l.b16 %v833
    %v905 = vunpack.c.l.b16 %v834
    %v906 = vunpack.c.l.b16 %v835
    %v907 = vunpack.c.l.b16 %v836
    %v908 = vunpack.c.l.b16 %v837
    %v909 = vunpack.c.l.b16 %v838
    %v910 = vunpack.c.l.b16 %v839
    %v911 = vunpack.c.l.b16 %v840
    %v912 = vunpack.c.l.b16 %v841
    %v913 = vunpack.c.l.b16 %v842
    %v914 = vunpack.c.l.b16 %v843
    %v915 = vunpack.c.l.b16 %v844
    %v916 = vunpack.c.l.b16 %v845
    %v917 = vunpack.c.l.b16 %v846
    %v918 = vunpack.c.l.b16 %v847
    %v919 = vunpack.c.l.b16 %v848
    %v920 = vunpack.c.l.b16 %v849
    %v921 = vunpack.c.l.b16 %v850
    %v922 = vunpack.c.l.b16 %v851
    %v923 = vpack.c.b16 %v892, %v891
    %v924 = vpack.c.b16 %v894, %v893
    %v925 = vpack.c.b16 %v896, %v895
    %v926 = vpack.c.b16 %v898, %v897
    %v927 = vpack.c.b16 %v900, %v899
    %v928 = vpack.c.b16 %v902, %v901
    %v929 = vpack.c.b16 %v904, %v903
    %v930 = vpack.c.b16 %v906, %v905
    %v931 = vpack.c.b16 %v908, %v907
    %v932 = vpack.c.b16 %v910, %v909
    %v933 = vpack.c.b16 %v912, %v911
    %v934 = vpack.c.b16 %v914, %v913
    %v935 = vpack.c.b16 %v916, %v915
    %v936 = vpack.c.b16 %v918, %v917
    %v937 = vpack.c.b16 %v920, %v919
    %v938 = vpack.c.b16 %v922, %v921
    %955 = vmatprep.subr.bf16.mxu0 0
    %956 = vmatpush1.bf16.msra.mxu0 %v923
    %957 = vmatprep.subr.bf16.mxu0 0
    %958 = vmatpush1.bf16.msra.mxu0 %v924
    %959 = vmatprep.subr.bf16.mxu0 0
    %960 = vmatpush1.bf16.msra.mxu0 %v925
    %961 = vmatprep.subr.bf16.mxu0 0
    %962 = vmatpush1.bf16.msra.mxu0 %v926
    %963 = vmatprep.subr.bf16.mxu0 0
    %964 = vmatpush1.bf16.msra.mxu0 %v927
    %965 = vmatprep.subr.bf16.mxu0 0
    %966 = vmatpush1.bf16.msra.mxu0 %v928
    %967 = vmatprep.subr.bf16.mxu0 0
    %968 = vmatpush1.bf16.msra.mxu0 %v929
    %969 = vmatprep.subr.bf16.mxu0 0
    %970 = vmatpush1.bf16.msra.mxu0 %v930
    %971 = vmatprep.subr.bf16.mxu0 0
    %972 = vmatpush1.bf16.msra.mxu0 %v931
    %973 = vmatprep.subr.bf16.mxu0 0
    %974 = vmatpush1.bf16.msra.mxu0 %v932
    %975 = vmatprep.subr.bf16.mxu0 0
    %976 = vmatpush1.bf16.msra.mxu0 %v933
    %977 = vmatprep.subr.bf16.mxu0 0
    %978 = vmatpush1.bf16.msra.mxu0 %v934
    %979 = vmatprep.subr.bf16.mxu0 0
    %980 = vmatpush1.bf16.msra.mxu0 %v935
    %981 = vmatprep.subr.bf16.mxu0 0
    %982 = vmatpush1.bf16.msra.mxu0 %v936
    %983 = vmatprep.subr.bf16.mxu0 0
    %984 = vmatpush1.bf16.msra.mxu0 %v937
    %985 = vmatprep.subr.bf16.mxu0 0
    %986 = vmatpush1.bf16.msra.mxu0 %v938
    %987 = vmatprep.mubr.bf16.mxu0 %v819
    %988 = vmatmul.mubr.bf16.gmra.mrb[0].mxu0 %v818
    %v989 = vpop.f32.mrb[0].mxu0
    %v990 = vadd.f32 %v857, %v989
    %v991 = vpop.f32.mrb[0].mxu0
    %v992 = vpop.f32.mrb[0].mxu0
    %v993 = vpop.f32.mrb[0].mxu0
    %994 = vdwg.mxu0
    %995 = vmax.xlane.f32.xlu0 %v990
    %v996 = vpop.xlane.xlu0 %995
    %v997 = vsub.f32 %v990, %v996
    %v998 = vmul.f32 %v997, 1.442695
    %v999 = vpow.pop %v998
    %1000 = vadd.xlane.f32.xlu0 %v999
    %v1001 = vpop.xlane.xlu0 %1000
    %v1002 = vrcp.pop %v1001
    %v1003 = vmul.f32 %v999, %v1002
    %1004 = vst [vmem:[#allocation11] sm:$0xff] %v1003
    // Predicated region
    $region58: #{sound_linear_net_forward.1} parent=1 // pred_check
      _
    $region59: #{sound_linear_net_forward.1} parent=1 // pred_check_branch
      %1006 = sbr.rel (0) target = $region61
    $region60: #{sound_linear_net_forward.1} parent=1 // pred_region
      %s1008 = ssub.s32 128, 128
      %1009 = vsyncadd [#allocation4], %s1008
      %s1011 = sshll.u32 [#allocation11], 4
      %s1012 = int_to_ptr.vmem [resolvable:$true] %s1011
      %1014 = dma.vmem_to_hbm [thread:$0]  %s1012, 128, %s9, [#allocation4]
    $region61: #{sound_linear_net_forward.1} parent=1 // pred_fallthru
      _
    // Predicated region
    $region62: #{sound_linear_net_forward.1} parent=1 // pred_check
      _
    $region63: #{sound_linear_net_forward.1} parent=1 // pred_check_branch
      %1016 = sbr.rel (0) target = $region65
    $region64: #{sound_linear_net_forward.1} parent=1 // pred_region
      %1017 = dma.done [#allocation4], 128
    $region65: #{sound_linear_net_forward.1} parent=1 // pred_fallthru
      _
    %1018 = vsyncpa [#allocation3], 1
    %1019 = vsyncpa [#allocation6], 1
    %1020 = vsyncpa [#allocation9], 1
    %1021 = vsyncpa [#allocation4], 1

</llo_original>
